<compile_context>
chip_gen: v5e
topology: v5e:2x2
jax: 0.10.0
libtpu: 0.0.40
codegen_flags: <defaults>
</compile_context>

<pallas_src>
import jax
import jax.numpy as jnp
from jax.experimental import pallas as pl
from jax.experimental.pallas import tpu as pltpu


def _conv1d_k3s2_kernel(x_ref, w12_ref, w0_ref, b_ref, o_ref, carry_ref):
    """One (batch i, c_out block o, L block l) grid step of Conv1d(k=3, s=2, p=1).

    x_ref    : (bl, 2C)  row j holds [x[2*(l*bl+j)] | x[2*(l*bl+j)+1]] on lanes
    w12_ref  : (2C, bo)  [W_tap1 ; W_tap2]   (multiply x[2j] / x[2j+1])
    w0_ref   : (C,  bo)  W_tap0              (multiplies x[2j-1])
    b_ref    : (1,  bo)  bias (f32)
    o_ref    : (bl, bo)  output rows [l*bl, l*bl + bl)
    carry_ref: (1,  bo)  f32, last tap-0 partial row of the previous L block
    """
    l = pl.program_id(2)

    @pl.when(l == 0)
    def _():
        # Conv's left zero pad: tap-0 contribution to output row 0 is zero.
        carry_ref[...] = jnp.zeros_like(carry_ref)

    bl, two_c = x_ref.shape
    c_in = two_c // 2

    x = x_ref[...]                                                     # (bl, 2C)

    # Taps k=1,2 fused: one MXU matmul with contraction depth 2C.
    m12 = jnp.dot(x, w12_ref[...], preferred_element_type=jnp.float32)       # (bl, bo)
    # Tap k=0 operand x[2j-1] is the odd phase (contiguous lane slice) of row j-1.
    p0 = jnp.dot(x[:, c_in:], w0_ref[...], preferred_element_type=jnp.float32)  # (bl, bo)

    carry_prev = carry_ref[...]                                        # (1, bo)
    carry_ref[...] = p0[bl - 1:bl, :]                                  # halo for next L block

    # Shift tap-0 partial down one output row on the XLU; the wrapped row 0 is
    # replaced by the carried halo (zero pad / previous block's last odd row).
    p0_shift = pltpu.roll(p0, shift=1, axis=0)
    is_row0 = jax.lax.broadcasted_iota(jnp.int32, p0_shift.shape, 0) == 0
    p0_shift = jnp.where(is_row0, carry_prev, p0_shift)

    # Note: in a ragged last L block the rows past Lout hold garbage; they only
    # reach discarded output rows and a carry that is re-zeroed at the next l==0.
    o_ref[...] = (m12 + p0_shift + b_ref[...]).astype(o_ref.dtype)


def _vmem_capacity_bytes(default=64 * 1024 * 1024):
    """Physical VMEM per TensorCore (v5e/v6e: 128 MiB, v7x: 64 MiB)."""
    try:
        cap = getattr(pltpu.get_tpu_info(), "vmem_capacity_bytes", None)
        if cap:
            return int(cap)
    except Exception:
        pass
    return int(default)


def _pick_blocks(lout, c_in, c_out, in_bytes, out_bytes, block_l, vmem_budget):
    """Pick (bl, bo): double-buffered blocks + weights + f32 temps fit the budget."""
    bo = c_out
    if c_out > 128:
        # Tile c_out (multiples of 128) so double-buffered weights stay a few MiB.
        w_bytes_per_o = 2 * 3 * c_in * in_bytes            # w12 + w0, double buffered
        max_bo = (vmem_budget // 4) // max(w_bytes_per_o, 1)
        max_bo = max(128, (max_bo // 128) * 128)
        bo = min(c_out, max_bo)

    if block_l is None:
        per_row = (2 * 2 * c_in * in_bytes                 # input block, double buffered
                   + 2 * bo * out_bytes                    # output block, double buffered
                   + 4 * bo * 4)                           # in-kernel f32 temporaries
        fixed = 2 * 3 * c_in * bo * in_bytes + 3 * bo * 4  # weights (x2), bias, carry
        cap = (vmem_budget - fixed) // max(per_row, 1)
        # Target >= ~2 MiB input blocks (amortize ~0.35us/grid-step, keep DMA near
        # the HBM roofline); scales inversely with C; hard-capped by VMEM budget.
        target = (2 * 1024 * 1024) // max(2 * c_in * in_bytes, 1)
        block_l = min(cap, max(256, target))
    block_l = max(8, (int(block_l) // 8) * 8)              # (8, 128) block rule

    bl = lout if lout <= block_l else block_l
    return bl, bo


def latent_downsample(x, weight, bias, *, block_l=None, compute_dtype=None):
    """Forward pass of LatentDownSample: Conv1d(C, C, 3, stride=2, padding=1).

    x      : (N, C_in, L)     (PyTorch NCL convention)
    weight : (C_out, C_in, 3) (PyTorch Conv1d weight layout)
    bias   : (C_out,)
    compute_dtype: optional matmul input dtype (e.g. jnp.bfloat16 for full MXU
        throughput and halved DMA bytes); accumulation is always f32.
    returns: (N, C_out, Lout), Lout = (L + 2 - 3)//2 + 1
    """
    n, c_in, length = x.shape
    c_out, c_in_w, ksz = weight.shape
    assert ksz == 3 and c_in_w == c_in
    lout = (length - 1) // 2 + 1
    out_dtype = x.dtype
    cdt = jnp.dtype(compute_dtype) if compute_dtype is not None else jnp.dtype(x.dtype)

    # ---- layout glue (one relayout each way; everything else is in-kernel) ----
    # NCL -> NLC; pad L to even (this IS the conv's right zero pad when L is odd);
    # fold the stride-2 phase pair into lanes: (N, Lout, 2*C) (free reshape).
    xc = x.astype(cdt)
    x_nlc = jnp.transpose(xc, (0, 2, 1))
    if length % 2 == 1:
        x_nlc = jnp.pad(x_nlc, ((0, 0), (0, 1), (0, 0)))
    x2c = x_nlc.reshape(n, lout, 2 * c_in)

    w_taps = jnp.transpose(weight, (2, 1, 0)).astype(cdt)   # (3, C_in, C_out)
    w12 = w_taps[1:3].reshape(2 * c_in, c_out)              # taps for x[2j], x[2j+1]
    w0 = w_taps[0]                                          # tap for x[2j-1]
    b2 = bias.reshape(1, c_out).astype(jnp.float32)

    # ---- per-generation sizing (v5e/v6e: 128 MiB VMEM, v7x: 64 MiB) ----
    vmem_cap = _vmem_capacity_bytes()
    vmem_limit = int(0.70 * vmem_cap)
    vmem_budget = int(0.80 * vmem_limit)
    bl, bo = _pick_blocks(lout, c_in, c_out, cdt.itemsize,
                          jnp.dtype(out_dtype).itemsize, block_l, vmem_budget)
    n_lblk = pl.cdiv(lout, bl)
    n_oblk = pl.cdiv(c_out, bo)

    flops = 2 * n * lout * 3 * c_in * c_out
    bytes_accessed = (x2c.size * cdt.itemsize
                      + (w12.size + w0.size) * cdt.itemsize
                      + b2.size * 4
                      + n * lout * c_out * jnp.dtype(out_dtype).itemsize)

    out_nlc = pl.pallas_call(
        _conv1d_k3s2_kernel,
        out_shape=jax.ShapeDtypeStruct((n, lout, c_out), out_dtype),
        grid=(n, n_oblk, n_lblk),
        in_specs=[
            pl.BlockSpec((pl.Squeezed(), bl, 2 * c_in), lambda i, o, l: (i, l, 0)),
            pl.BlockSpec((2 * c_in, bo), lambda i, o, l: (0, o)),
            pl.BlockSpec((c_in, bo), lambda i, o, l: (0, o)),
            pl.BlockSpec((1, bo), lambda i, o, l: (0, o)),
        ],
        out_specs=pl.BlockSpec((pl.Squeezed(), bl, bo), lambda i, o, l: (i, l, o)),
        scratch_shapes=[pltpu.VMEM((1, bo), jnp.float32)],
        compiler_params=pltpu.CompilerParams(
            dimension_semantics=("parallel", "parallel", "arbitrary"),
            vmem_limit_bytes=vmem_limit,
        ),
        cost_estimate=pl.CostEstimate(
            flops=flops, transcendentals=0, bytes_accessed=bytes_accessed),
    )(x2c, w12, w0, b2)

    return jnp.transpose(out_nlc, (0, 2, 1))                # back to (N, C_out, Lout)


def init_params(key, in_ch, kernel_size=3):
    """Matches the PyTorch module init: xavier_uniform_ on weight, zeros on bias."""
    fan_in = in_ch * kernel_size
    fan_out = in_ch * kernel_size
    bound = (6.0 / (fan_in + fan_out)) ** 0.5
    weight = jax.random.uniform(key, (in_ch, in_ch, kernel_size),
                                dtype=jnp.float32, minval=-bound, maxval=bound)
    bias = jnp.zeros((in_ch,), dtype=jnp.float32)
    return weight, bias


def _reference(x, weight, bias):
    return jax.lax.conv_general_dilated(
        x, weight, window_strides=(2,), padding=[(1, 1)],
        dimension_numbers=("NCH", "OIH", "NCH")) + bias[None, :, None]


if __name__ == "__main__":
    key = jax.random.PRNGKey(0)
    k_x, k_w, k_x2, k_x3 = jax.random.split(key, 4)

    # Primary small case consistent with the module: batch=2, channels=4, L=16.
    N, C, L = 2, 4, 16
    x = jax.random.normal(k_x, (N, C, L), dtype=jnp.float32)
    weight, bias = init_params(k_w, C)

    out = jax.block_until_ready(latent_downsample(x, weight, bias))
    ref = _reference(x, weight, bias)
    assert out.shape == (N, C, (L + 2 - 3) // 2 + 1)
    assert jnp.allclose(out, ref, atol=1e-5, rtol=1e-5)

    # Multi-L-block case: exercises the carried tap-0 halo across grid steps.
    x2 = jax.random.normal(k_x2, (N, C, 64), dtype=jnp.float32)
    out2 = jax.block_until_ready(latent_downsample(x2, weight, bias, block_l=8))
    assert jnp.allclose(out2, _reference(x2, weight, bias), atol=1e-5, rtol=1e-5)

    # Odd L + ragged last block (Lout=19 with 8-row blocks): exercises the
    # wrapper right zero pad and the partial-block writeback.
    x3 = jax.random.normal(k_x3, (N, C, 37), dtype=jnp.float32)
    out3 = jax.block_until_ready(latent_downsample(x3, weight, bias, block_l=8))
    assert jnp.allclose(out3, _reference(x3, weight, bias), atol=1e-5, rtol=1e-5)

    # bf16 compute path (full-rate MXU, halved DMA bytes), looser tolerance.
    out4 = jax.block_until_ready(
        latent_downsample(x, weight, bias, compute_dtype=jnp.bfloat16))
    assert jnp.allclose(out4, ref, atol=1.5e-1, rtol=5e-2)

    print("KERNEL_OK")
</pallas_src>

<mosaic_0001>
module attributes {stable_mosaic.version = 11 : i64} {
  func.func @_conv1d_k3s2_kernel(%arg0: i32, %arg1: i32, %arg2: i32, %arg3: memref<1x8x8xf32, #tpu.memory_space<vmem>>, %arg4: memref<8x4xf32, #tpu.memory_space<vmem>>, %arg5: memref<4x4xf32, #tpu.memory_space<vmem>>, %arg6: memref<1x4xf32, #tpu.memory_space<vmem>>, %arg7: memref<1x8x4xf32, #tpu.memory_space<vmem>>, %arg8: memref<1x4xf32, #tpu.memory_space<vmem>>) attributes {dimension_semantics = [#tpu.dimension_semantics<parallel>, #tpu.dimension_semantics<parallel>, #tpu.dimension_semantics<arbitrary>], iteration_bounds = array<i64: 2, 1, 1>, scalar_prefetch = 0 : i64, scratch_operands = 1 : i64, tpu.core_type = #tpu.core_type<tc>, window_params = [{transform_indices = @transform_0, window_bounds = array<i64: 1, 8, 8>}, {transform_indices = @transform_1, window_bounds = array<i64: 8, 4>}, {transform_indices = @transform_2, window_bounds = array<i64: 4, 4>}, {transform_indices = @transform_3, window_bounds = array<i64: 1, 4>}, {transform_indices = @transform_4, window_bounds = array<i64: 1, 8, 4>}]} {
    %c0_i32 = arith.constant 0 : i32
    %0 = arith.cmpi eq, %arg2, %c0_i32 : i32
    %1 = arith.extui %0 : i1 to i32
    %c0_i32_0 = arith.constant 0 : i32
    %2 = arith.cmpi ne, %1, %c0_i32_0 : i32
    scf.if %2 {
      %cst_18 = arith.constant 0.000000e+00 : f32
      %27 = vector.broadcast %cst_18 : f32 to vector<1x4xf32>
      %c0_19 = arith.constant 0 : index
      %c0_20 = arith.constant 0 : index
      %28 = vector.load %arg8[%c0_19, %c0_20] : memref<1x4xf32, #tpu.memory_space<vmem>>, vector<1x4xf32>
      tpu.vector_store %arg8[%c0_19, %c0_20], %27 {strides = array<i32>} : memref<1x4xf32, #tpu.memory_space<vmem>>, vector<1x4xf32>,
    } else {
    }
    %c0 = arith.constant 0 : index
    %c0_1 = arith.constant 0 : index
    %c0_2 = arith.constant 0 : index
    %3 = vector.load %arg3[%c0, %c0_1, %c0_2] : memref<1x8x8xf32, #tpu.memory_space<vmem>>, vector<1x8x8xf32>
    %4 = vector.shape_cast %3 : vector<1x8x8xf32> to vector<8x8xf32>
    %c0_3 = arith.constant 0 : index
    %c0_4 = arith.constant 0 : index
    %5 = vector.load %arg4[%c0_3, %c0_4] : memref<8x4xf32, #tpu.memory_space<vmem>>, vector<8x4xf32>
    %cst = arith.constant dense<0.000000e+00> : vector<8x4xf32>
    %6 = tpu.matmul %4, %5, %cst {dimension_numbers = #tpu.dot_dimension_numbers<[1], [0], [0], [1], [0, 0, 1, 1], [], []>} : vector<8x8xf32>, vector<8x4xf32>, vector<8x4xf32> -> vector<8x4xf32>
    %7 = vector.extract_strided_slice %4 {offsets = [0, 4], sizes = [8, 4], strides = [1, 1]} : vector<8x8xf32> to vector<8x4xf32>
    %c0_5 = arith.constant 0 : index
    %c0_6 = arith.constant 0 : index
    %8 = vector.load %arg5[%c0_5, %c0_6] : memref<4x4xf32, #tpu.memory_space<vmem>>, vector<4x4xf32>
    %cst_7 = arith.constant dense<0.000000e+00> : vector<8x4xf32>
    %9 = tpu.matmul %7, %8, %cst_7 {dimension_numbers = #tpu.dot_dimension_numbers<[1], [0], [0], [1], [0, 0, 1, 1], [], []>} : vector<8x4xf32>, vector<4x4xf32>, vector<8x4xf32> -> vector<8x4xf32>
    %c0_8 = arith.constant 0 : index
    %c0_9 = arith.constant 0 : index
    %10 = vector.load %arg8[%c0_8, %c0_9] : memref<1x4xf32, #tpu.memory_space<vmem>>, vector<1x4xf32>
    %11 = vector.extract_strided_slice %9 {offsets = [7, 0], sizes = [1, 4], strides = [1, 1]} : vector<8x4xf32> to vector<1x4xf32>
    %c0_10 = arith.constant 0 : index
    %c0_11 = arith.constant 0 : index
    %12 = vector.load %arg8[%c0_10, %c0_11] : memref<1x4xf32, #tpu.memory_space<vmem>>, vector<1x4xf32>
    tpu.vector_store %arg8[%c0_10, %c0_11], %11 {strides = array<i32>} : memref<1x4xf32, #tpu.memory_space<vmem>>, vector<1x4xf32>,
    %c1_i32 = arith.constant 1 : i32
    %13 = tpu.dynamic_rotate %9 by %c1_i32 dim 0 : vector<8x4xf32>, i32 -> vector<8x4xf32>
    %14 = tpu.iota {dimensions = array<i32: 0>} : vector<8x4xi32>
    %c0_i32_12 = arith.constant 0 : i32
    %15 = vector.broadcast %c0_i32_12 : i32 to vector<8x4xi32>
    %16 = arith.cmpi eq, %14, %15 : vector<8x4xi32>
    %17 = vector.shape_cast %10 : vector<1x4xf32> to vector<1x4xf32>
    %18 = vector.broadcast %17 : vector<1x4xf32> to vector<8x4xf32>
    %19 = arith.select %16, %18, %13 : vector<8x4xi1>, vector<8x4xf32>
    %20 = arith.addf %6, %19 : vector<8x4xf32>
    %c0_13 = arith.constant 0 : index
    %c0_14 = arith.constant 0 : index
    %21 = vector.load %arg6[%c0_13, %c0_14] : memref<1x4xf32, #tpu.memory_space<vmem>>, vector<1x4xf32>
    %22 = vector.broadcast %21 : vector<1x4xf32> to vector<8x4xf32>
    %23 = arith.addf %20, %22 : vector<8x4xf32>
    %c0_15 = arith.constant 0 : index
    %c0_16 = arith.constant 0 : index
    %c0_17 = arith.constant 0 : index
    %24 = vector.load %arg7[%c0_15, %c0_16, %c0_17] : memref<1x8x4xf32, #tpu.memory_space<vmem>>, vector<1x8x4xf32>
    %25 = vector.shape_cast %24 : vector<1x8x4xf32> to vector<8x4xf32>
    %26 = vector.shape_cast %23 : vector<8x4xf32> to vector<1x8x4xf32>
    tpu.vector_store %arg7[%c0_15, %c0_16, %c0_17], %26 {strides = array<i32>} : memref<1x8x4xf32, #tpu.memory_space<vmem>>, vector<1x8x4xf32>,
    return
  }
  func.func @transform_0(%arg0: i32, %arg1: i32, %arg2: i32) -> (i32, i32, i32) {
    %c0_i32 = arith.constant 0 : i32
    %c0_i32_0 = arith.constant 0 : i32
    return %arg0, %arg2, %c0_i32 : i32, i32, i32
  }
  func.func @transform_1(%arg0: i32, %arg1: i32, %arg2: i32) -> (i32, i32) {
    %c0_i32 = arith.constant 0 : i32
    %c0_i32_0 = arith.constant 0 : i32
    return %c0_i32, %arg1 : i32, i32
  }
  func.func @transform_2(%arg0: i32, %arg1: i32, %arg2: i32) -> (i32, i32) {
    %c0_i32 = arith.constant 0 : i32
    %c0_i32_0 = arith.constant 0 : i32
    return %c0_i32, %arg1 : i32, i32
  }
  func.func @transform_3(%arg0: i32, %arg1: i32, %arg2: i32) -> (i32, i32) {
    %c0_i32 = arith.constant 0 : i32
    %c0_i32_0 = arith.constant 0 : i32
    return %c0_i32, %arg1 : i32, i32
  }
  func.func @transform_4(%arg0: i32, %arg1: i32, %arg2: i32) -> (i32, i32, i32) {
    %c0_i32 = arith.constant 0 : i32
    return %arg0, %arg2, %arg1 : i32, i32, i32
  }
}

</mosaic_0001>

<llo_original>
// kernel: tpu_custom_call.1
$region0: #{tpu_custom_call.1}
  #allocation0 [shape = 'u32[]', space=smem, size = 0x4, offset = 0x4, fixed_abs, tag = 'smem constant byte address 0x4 - core index']
  #allocation1 [shape = 'u32[72,128]{1,0:T(1,128)}', space=vmem, size = 0x9000, scoped, tag = 'internal scratch']
  #allocation2 [shape = 'f32[1,4]{1,0:T(1,128)}', space=vmem, size = 0x200, scoped, tag = 'scratch operand']
  %s0 = inlined_call_operand.hbm [shape: f32[2,8,8], index: 0, kind: input, shape index: {}]
  %s1 = inlined_call_operand.vmem [shape: f32[8,4], index: 1, kind: input, shape index: {}]
  %s2 = inlined_call_operand.vmem [shape: f32[4,4], index: 2, kind: input, shape index: {}]
  %s3 = inlined_call_operand.vmem [shape: f32[1,4], index: 3, kind: input, shape index: {}]
  %s4 = inlined_call_operand.vmem [shape: f32[2,8,4], index: 4, kind: output, shape index: {}]
  %s5 = sld [smem:[#allocation0]]
  $region57: #{tpu_custom_call.1} parent=0
    _
  %s7 = ssub.s32 1, %s5
  %s8 = scalar_select 0, %s7, %s5
  $region1: #{tpu_custom_call.1} parent=0
    #allocation3 [shape = 'u8[8192]{0}', space=vmem, size = 0x2000, scoped, tag = 'input window, operand 0']
    #allocation4 [shape = 's32[2]{0}', space=sflag, size = 0x8, scoped, tag = 'scoped memory for tpu_custom_call.1']
    %9 = vsyncpa [#allocation4], 0
    %s10 = scalar_lea.sflag [#allocation4], 1
    %11 = vsyncpa %s10, 0
    loop: start=0, step=1, limit=4
    $region2: #{tpu_custom_call.1} parent=1 // loop_pre_header
      _
    $region3: #{tpu_custom_call.1} parent=1 // loop_header
      %s13 = sphi 0, %s17
      %p14 = scmp.ge.s32.totalorder %s13, 4
      %s20 = sphi 0, %s39
      %s21 = sphi 0, %s35
      %s22 = sphi 0, %s31
      %s23 = sphi 0, %s20
      %s24 = sphi 0, %s21
      %s25 = sphi 0, %s22
      %s26 = sphi 0, %s23
      %s27 = sphi 0, %s24
      %s28 = sphi 0, %s25
      %s44 = sphi 0, %s46
      %s47 = sphi 0, %s44
      %s48 = sphi 0, %s47
      %s64 = sphi 0, %s48
      %s70 = sphi 0, %s72
      %s73 = sphi 0, %s70
      %s74 = sphi 0, %s73
      %s90 = sphi 0, %s74
      %s96 = sphi 0, %s98
      %s99 = sphi 0, %s96
      %s100 = sphi 0, %s99
      %s116 = sphi 0, %s100
      %s122 = sphi 0, %s124
      %s125 = sphi 0, %s122
      %s126 = sphi 0, %s125
      %s142 = sphi 0, %s126
      %s152 = sphi 0, %s154
      %s155 = sphi 0, %s152
      %s156 = sphi 0, %s155
      %s172 = sphi 0, %s156
    $region4: #{tpu_custom_call.1} parent=1 // loop_header_branch
      %16 = sbr.rel (%p14) target = $region8
    $region5: #{tpu_custom_call.1} parent=1 // loop_body
      %s18 = ssub.s32 %s13, 1
      %s19 = ssub.s32 %s13, 2
      %s29 = sadd.s32 1, %s22
      %p30 = scmp.ge.s32.totalorder %s29, 1
      %s31 = scalar_select %p30, 0, %s29
      %s32 = sadd.s32 1, %s21
      %s33 = scalar_select %p30, %s32, %s21
      %p34 = scmp.ge.s32.totalorder %s33, 1
      %s35 = scalar_select %p34, 0, %s33
      %s36 = sadd.s32 1, %s20
      %s37 = scalar_select %p34, %s36, %s20
      %p38 = scmp.ge.s32.totalorder %s37, 2
      %s39 = scalar_select %p38, 0, %s37
      %s40 = ssub.s32 %s20, %s39
      %s41 = ssub.s32 %s22, %s31
      %s42 = sor.u32 %s40, %s41
      %p43 = scmp.eq.s32.totalorder %s42, 0
      %s45 = sadd.s32 %s44, 1
      %s46 = scalar_select %p43, %s44, %s45
      %p49 = pneg %p43
      %p50 = scmp.eq.s32.totalorder %s13, 1
      %p51 = por %p49, %p50
      %p52 = scmp.ne.s32.totalorder %s44, %s47
      %p53 = scmp.eq.s32.totalorder %s13, 0
      %p54 = por %p52, %p53
      %p55 = scmp.ne.s32.totalorder %s44, %s47
      %p56 = scmp.eq.s32.totalorder %s18, 1
      %p57 = por %p55, %p56
      %p58 = scmp.ne.s32.totalorder %s47, %s48
      %p59 = scmp.eq.s32.totalorder %s18, 0
      %p60 = por %p58, %p59
      %p61 = scmp.ne.s32.totalorder %s47, %s48
      %p62 = scmp.eq.s32.totalorder %s19, 1
      %p63 = por %p61, %p62
      %p65 = scmp.ne.s32.totalorder %s48, %s64
      %p66 = scmp.eq.s32.totalorder %s19, 0
      %p67 = por %p65, %p66
      %s68 = ssub.s32 %s21, %s35
      %p69 = scmp.eq.s32.totalorder %s68, 0
      %s71 = sadd.s32 %s70, 1
      %s72 = scalar_select %p69, %s70, %s71
      %p75 = pneg %p69
      %p76 = scmp.eq.s32.totalorder %s13, 1
      %p77 = por %p75, %p76
      %p78 = scmp.ne.s32.totalorder %s70, %s73
      %p79 = scmp.eq.s32.totalorder %s13, 0
      %p80 = por %p78, %p79
      %p81 = scmp.ne.s32.totalorder %s70, %s73
      %p82 = scmp.eq.s32.totalorder %s18, 1
      %p83 = por %p81, %p82
      %p84 = scmp.ne.s32.totalorder %s73, %s74
      %p85 = scmp.eq.s32.totalorder %s18, 0
      %p86 = por %p84, %p85
      %p87 = scmp.ne.s32.totalorder %s73, %s74
      %p88 = scmp.eq.s32.totalorder %s19, 1
      %p89 = por %p87, %p88
      %p91 = scmp.ne.s32.totalorder %s74, %s90
      %p92 = scmp.eq.s32.totalorder %s19, 0
      %p93 = por %p91, %p92
      %s94 = ssub.s32 %s21, %s35
      %p95 = scmp.eq.s32.totalorder %s94, 0
      %s97 = sadd.s32 %s96, 1
      %s98 = scalar_select %p95, %s96, %s97
      %p101 = pneg %p95
      %p102 = scmp.eq.s32.totalorder %s13, 1
      %p103 = por %p101, %p102
      %p104 = scmp.ne.s32.totalorder %s96, %s99
      %p105 = scmp.eq.s32.totalorder %s13, 0
      %p106 = por %p104, %p105
      %p107 = scmp.ne.s32.totalorder %s96, %s99
      %p108 = scmp.eq.s32.totalorder %s18, 1
      %p109 = por %p107, %p108
      %p110 = scmp.ne.s32.totalorder %s99, %s100
      %p111 = scmp.eq.s32.totalorder %s18, 0
      %p112 = por %p110, %p111
      %p113 = scmp.ne.s32.totalorder %s99, %s100
      %p114 = scmp.eq.s32.totalorder %s19, 1
      %p115 = por %p113, %p114
      %p117 = scmp.ne.s32.totalorder %s100, %s116
      %p118 = scmp.eq.s32.totalorder %s19, 0
      %p119 = por %p117, %p118
      %s120 = ssub.s32 %s21, %s35
      %p121 = scmp.eq.s32.totalorder %s120, 0
      %s123 = sadd.s32 %s122, 1
      %s124 = scalar_select %p121, %s122, %s123
      %p127 = pneg %p121
      %p128 = scmp.eq.s32.totalorder %s13, 1
      %p129 = por %p127, %p128
      %p130 = scmp.ne.s32.totalorder %s122, %s125
      %p131 = scmp.eq.s32.totalorder %s13, 0
      %p132 = por %p130, %p131
      %p133 = scmp.ne.s32.totalorder %s122, %s125
      %p134 = scmp.eq.s32.totalorder %s18, 1
      %p135 = por %p133, %p134
      %p136 = scmp.ne.s32.totalorder %s125, %s126
      %p137 = scmp.eq.s32.totalorder %s18, 0
      %p138 = por %p136, %p137
      %p139 = scmp.ne.s32.totalorder %s125, %s126
      %p140 = scmp.eq.s32.totalorder %s19, 1
      %p141 = por %p139, %p140
      %p143 = scmp.ne.s32.totalorder %s126, %s142
      %p144 = scmp.eq.s32.totalorder %s19, 0
      %p145 = por %p143, %p144
      %s146 = ssub.s32 %s20, %s39
      %s147 = ssub.s32 %s22, %s31
      %s148 = sor.u32 %s146, %s147
      %s149 = ssub.s32 %s21, %s35
      %s150 = sor.u32 %s148, %s149
      %p151 = scmp.eq.s32.totalorder %s150, 0
      %s153 = sadd.s32 %s152, 1
      %s154 = scalar_select %p151, %s152, %s153
      %p157 = pneg %p151
      %p158 = scmp.eq.s32.totalorder %s13, 1
      %p159 = por %p157, %p158
      %p160 = scmp.ne.s32.totalorder %s152, %s155
      %p161 = scmp.eq.s32.totalorder %s13, 0
      %p162 = por %p160, %p161
      %p163 = scmp.ne.s32.totalorder %s152, %s155
      %p164 = scmp.eq.s32.totalorder %s18, 1
      %p165 = por %p163, %p164
      %p166 = scmp.ne.s32.totalorder %s155, %s156
      %p167 = scmp.eq.s32.totalorder %s18, 0
      %p168 = por %p166, %p167
      %p169 = scmp.ne.s32.totalorder %s155, %s156
      %p170 = scmp.eq.s32.totalorder %s19, 1
      %p171 = por %p169, %p170
      %p173 = scmp.ne.s32.totalorder %s156, %s172
      %p174 = scmp.eq.s32.totalorder %s19, 0
      %p175 = por %p173, %p174
      %p176 = scmp.le.s32.totalorder 1, %s13
      %p177 = scmp.lt.s32.totalorder %s13, 3
      %p178 = pnand %p176, %p177
      %p179 = pneg %p178
      // Predicated region
      $region9: #{tpu_custom_call.1} parent=5 // pred_check
        _
      $region10: #{tpu_custom_call.1} parent=5 // pred_check_branch
        %181 = sbr.rel (%p178) target = $region12
      $region11: #{tpu_custom_call.1} parent=5 // pred_region
        %s182 = ssub.s32 %s13, 1
        // Predicated region
        $region13: #{tpu_custom_call.1} parent=11 // pred_check
          %p183 = pneg %p86
        $region14: #{tpu_custom_call.1} parent=11 // pred_check_branch
          %185 = sbr.rel (%p183) target = $region16
        $region15: #{tpu_custom_call.1} parent=11 // pred_region
          %p186 = scmp.lt.s32.totalorder %s24, 0
          %s187 = scalar_select %p186, %s24, 0
          %s188 = smul.addr %s187, 8
          %s189 = scalar_lea.vmem %s1, %s188
        $region16: #{tpu_custom_call.1} parent=11 // pred_fallthru
          _
        // Predicated region
        $region17: #{tpu_custom_call.1} parent=11 // pred_check
          %p190 = pneg %p112
        $region18: #{tpu_custom_call.1} parent=11 // pred_check_branch
          %192 = sbr.rel (%p190) target = $region20
        $region19: #{tpu_custom_call.1} parent=11 // pred_region
          %p193 = scmp.lt.s32.totalorder %s24, 0
          %s194 = scalar_select %p193, %s24, 0
          %s195 = smul.addr %s194, 4
          %s196 = scalar_lea.vmem %s2, %s195
        $region20: #{tpu_custom_call.1} parent=11 // pred_fallthru
          _
        // Predicated region
        $region21: #{tpu_custom_call.1} parent=11 // pred_check
          %p197 = pneg %p138
        $region22: #{tpu_custom_call.1} parent=11 // pred_check_branch
          %199 = sbr.rel (%p197) target = $region24
        $region23: #{tpu_custom_call.1} parent=11 // pred_region
          %p200 = scmp.lt.s32.totalorder %s24, 0
          %s201 = scalar_select %p200, %s24, 0
          %s202 = scalar_lea.vmem %s3, %s201
        $region24: #{tpu_custom_call.1} parent=11 // pred_fallthru
          _
      $region12: #{tpu_custom_call.1} parent=5 // pred_fallthru
        _
      %p203 = scmp.lt.s32.totalorder %s13, 2
      // Predicated region
      $region25: #{tpu_custom_call.1} parent=5 // pred_check
        %p204 = pneg %p203
      $region26: #{tpu_custom_call.1} parent=5 // pred_check_branch
        %206 = sbr.rel (%p204) target = $region28
      $region27: #{tpu_custom_call.1} parent=5 // pred_region
        // Predicated region
        $region29: #{tpu_custom_call.1} parent=27 // pred_check
          %p207 = pneg %p54
        $region30: #{tpu_custom_call.1} parent=27 // pred_check_branch
          %209 = sbr.rel (%p207) target = $region32
        $region31: #{tpu_custom_call.1} parent=27 // pred_region
          %s210 = sand.u32 %s44, 1
          %s211 = scalar_lea.sflag [#allocation4], %s210
          %s212 = sand.u32 %s44, 1
          %s213 = smul.addr %s212, 8
          %s214 = scalar_lea.vmem [#allocation3], %s213
          %216 = vsyncadd %s211, 0
          %s217 = sadd.s32 %s22, %s20
          %s218 = smul.addr %s217, 8
          %s219 = scalar_lea.hbm %s0, %s218
          %s221 = sshll.u32 %s219, 4
          %s222 = int_to_ptr.hbm [resolvable:$true] %s221
          %s223 = sshll.u32 %s214, 4
          %s224 = int_to_ptr.vmem [resolvable:$true] %s223
          %226 = dma.hbm_to_vmem [thread:$0]  %s222, 128, %s224, %s211
        $region32: #{tpu_custom_call.1} parent=27 // pred_fallthru
          _
      $region28: #{tpu_custom_call.1} parent=5 // pred_fallthru
        _
      %p227 = scmp.le.s32.totalorder 1, %s13
      %p228 = scmp.lt.s32.totalorder %s13, 3
      %p229 = pnand %p227, %p228
      %p230 = pneg %p229
      // Predicated region
      $region33: #{tpu_custom_call.1} parent=5 // pred_check
        _
      $region34: #{tpu_custom_call.1} parent=5 // pred_check_branch
        %232 = sbr.rel (%p229) target = $region36
      $region35: #{tpu_custom_call.1} parent=5 // pred_region
        %s233 = ssub.s32 %s13, 1
        %s234 = sand.u32 %s47, 1
        %s235 = scalar_lea.sflag [#allocation4], %s234
        %s236 = sand.u32 %s47, 1
        %s237 = smul.addr %s236, 8
        %s238 = scalar_lea.vmem [#allocation3], %s237
        // Predicated region
        $region37: #{tpu_custom_call.1} parent=35 // pred_check
          %p239 = pneg %p60
        $region38: #{tpu_custom_call.1} parent=35 // pred_check_branch
          %241 = sbr.rel (%p239) target = $region40
        $region39: #{tpu_custom_call.1} parent=35 // pred_region
          %243 = dma.done %s235, 128
        $region40: #{tpu_custom_call.1} parent=35 // pred_fallthru
          _
        %s244 = sand.u32 %s47, 1
        %s245 = scalar_lea.sflag [#allocation4], %s244
        %s246 = sand.u32 %s47, 1
        %s247 = smul.addr %s246, 8
        %s248 = scalar_lea.vmem [#allocation3], %s247
        %p249 = pneg %p60
        %p250 = pneg %p57
        %p251 = scmp.lt.s32.totalorder %s24, 0
        %s252 = scalar_select %p251, %s24, 0
        %s253 = smul.addr %s252, 8
        %s254 = scalar_lea.vmem %s1, %s253
        %p255 = pneg %p86
        %p256 = pneg %p83
        %p257 = scmp.lt.s32.totalorder %s24, 0
        %s258 = scalar_select %p257, %s24, 0
        %s259 = smul.addr %s258, 4
        %s260 = scalar_lea.vmem %s2, %s259
        %p261 = pneg %p112
        %p262 = pneg %p109
        %p263 = scmp.lt.s32.totalorder %s24, 0
        %s264 = scalar_select %p263, %s24, 0
        %s265 = scalar_lea.vmem %s3, %s264
        %p266 = pneg %p138
        %p267 = pneg %p135
        %p268 = pneg %p168
        %p269 = pneg %p165
        %p270 = scmp.lt.s32.totalorder %s23, 1
        %s271 = scalar_select %p270, %s23, 1
        %p272 = scmp.lt.s32.totalorder %s25, 0
        %s273 = scalar_select %p272, %s25, 0
        %p274 = scmp.lt.s32.totalorder %s24, 0
        %s275 = scalar_select %p274, %s24, 0
        %s276 = sadd.s32 %s275, %s273
        %s277 = sadd.s32 %s276, %s271
        %s278 = smul.addr %s277, 8
        %s279 = scalar_lea.vmem %s4, %s278
        %p280 = scmp.lt.s32.totalorder %s24, 0
        %s281 = scalar_select %p280, %s24, 0
        %s282 = smul.addr %s281, 8
        %s283 = scalar_lea.vmem %s1, %s282
        %p284 = scmp.lt.s32.totalorder %s24, 0
        %s285 = scalar_select %p284, %s24, 0
        %s286 = smul.addr %s285, 4
        %s287 = scalar_lea.vmem %s2, %s286
        %p288 = scmp.lt.s32.totalorder %s24, 0
        %s289 = scalar_select %p288, %s24, 0
        %s290 = scalar_lea.vmem %s3, %s289
        %p291 = scmp.lt.s32.totalorder %s23, 1
        %s292 = scalar_select %p291, %s23, 1
        %p293 = scmp.lt.s32.totalorder %s25, 0
        %s294 = scalar_select %p293, %s25, 0
        %p295 = scmp.lt.s32.totalorder %s24, 0
        %s296 = scalar_select %p295, %s24, 0
        %s297 = sadd.s32 %s296, %s294
        %s298 = sadd.s32 %s297, %s292
        %s299 = smul.addr %s298, 8
        %s300 = scalar_lea.vmem %s4, %s299
        %p301 = scmp.eq.s32.totalorder %s25, 0
        // Predicated region
        $region41: #{tpu_custom_call.1} parent=35 // pred_check
          %p302 = pneg %p301
        $region42: #{tpu_custom_call.1} parent=35 // pred_check_branch
          %304 = sbr.rel (%p302) target = $region44
        $region43: #{tpu_custom_call.1} parent=35 // pred_region
          %vm305 = vcmask 24576
          %306 = vst.msk [vmem:[#allocation2] sm:$0x1] %vm305, 0.0
        $region44: #{tpu_custom_call.1} parent=35 // pred_fallthru
          _
        %v307 = vld [vmem:[%s238] sm:$0xff]
        %v308 = vld [vmem:[%s283] sm:$0xff]
        %v309 = vld [vmem:[%s287] sm:$0xf]
        %311 = vrot.lane.b32.xlu0 %v307, 124
        %v312 = vpop.permute.xlu0 %311
        %vm313 = vcmask 31744
        %v314 = vsel %vm313, %v312, 0
        %vm316 = vcmask 1043456
        %v318 = vsel %vm316, %v309, 0
        %320 = vmatpush.msra.mxu0 0.0
        %321 = vmatpush.msra.mxu0 0.0
        %322 = vmatpush.msra.mxu0 0.0
        %323 = vmatpush.msra.mxu0 0.0
        %324 = vmatpush.msra.mxu0 0.0
        %325 = vmatpush.msra.mxu0 0.0
        %326 = vmatpush.msra.mxu0 0.0
        %327 = vmatpush.msra.mxu0 0.0
        %328 = vmatpush.msra.mxu0 0.0
        %329 = vmatpush.msra.mxu0 0.0
        %330 = vmatpush.msra.mxu0 0.0
        %331 = vmatpush.msra.mxu0 0.0
        %332 = vmatpush.msra.mxu0 0.0
        %333 = vmatpush.msra.mxu0 0.0
        %334 = vmatpush.msra.mxu0 0.0
        %335 = vmatpush.msra.mxu0 %v318
        %336 = vmatmul.f32.gmra.mxu0 %v314
        %v337 = vpop.f32.mrf.mxu0
        %v338 = vadd.f32 0.0, %v337
        %339 = vdwg.mxu0
        %v340 = vld [vmem:[#allocation2] sm:$0x1]
        %vm341 = vcmask 31751
        %342 = vst.msk [vmem:[#allocation2 - $0x7] sm:$0x80] %vm341, %v338
        %v343 = vrot.slane %v338, 7
        %v344 = vlaneseq
        %v345 = vshrl.u32 %v344, 7
        %vm346 = vcmp.eq.s32.totalorder %v345, 0
        %v348 = vperm.slane %v340, 0
        %v350 = vsel %vm346, %v348, %v343
        %vm351 = vcmask 64512
        %v352 = vsel %vm351, %v307, 0
        %354 = vmatpush.msra.mxu0 0.0
        %355 = vmatpush.msra.mxu0 0.0
        %356 = vmatpush.msra.mxu0 0.0
        %357 = vmatpush.msra.mxu0 0.0
        %358 = vmatpush.msra.mxu0 0.0
        %359 = vmatpush.msra.mxu0 0.0
        %360 = vmatpush.msra.mxu0 0.0
        %361 = vmatpush.msra.mxu0 0.0
        %362 = vmatpush.msra.mxu0 0.0
        %363 = vmatpush.msra.mxu0 0.0
        %364 = vmatpush.msra.mxu0 0.0
        %365 = vmatpush.msra.mxu0 0.0
        %366 = vmatpush.msra.mxu0 0.0
        %367 = vmatpush.msra.mxu0 0.0
        %368 = vmatpush.msra.mxu0 0.0
        %369 = vmatpush.msra.mxu0 %v308
        %370 = vmatmul.f32.gmra.mxu0 %v352
        %v371 = vpop.f32.mrf.mxu0
        %v372 = vadd.f32 %v350, %v371
        %373 = vdwg.mxu0
        %v374 = vld [vmem:[%s290] sm:$0x1]
        %v376 = vperm.slane %v374, 0
        %v378 = vadd.f32 %v372, %v376
        %379 = vst.msk [vmem:[%s300] sm:$0xff] %vm313, %v378
        %p380 = scmp.lt.s32.totalorder %s23, 1
        %s381 = scalar_select %p380, %s23, 1
        %p382 = scmp.lt.s32.totalorder %s25, 0
        %s383 = scalar_select %p382, %s25, 0
        %p384 = scmp.lt.s32.totalorder %s24, 0
        %s385 = scalar_select %p384, %s24, 0
        %s386 = sadd.s32 %s385, %s383
        %s387 = sadd.s32 %s386, %s381
        %s388 = smul.addr %s387, 8
        %s389 = scalar_lea.vmem %s4, %s388
        // Predicated region
        $region45: #{tpu_custom_call.1} parent=35 // pred_check
          %p390 = pneg %p165
        $region46: #{tpu_custom_call.1} parent=35 // pred_check_branch
          %392 = sbr.rel (%p390) target = $region48
        $region47: #{tpu_custom_call.1} parent=35 // pred_region
          _
        $region48: #{tpu_custom_call.1} parent=35 // pred_fallthru
          _
      $region36: #{tpu_custom_call.1} parent=5 // pred_fallthru
        _
      %p393 = scmp.le.s32.totalorder 2, %s13
      // Predicated region
      $region49: #{tpu_custom_call.1} parent=5 // pred_check
        %p394 = pneg %p393
      $region50: #{tpu_custom_call.1} parent=5 // pred_check_branch
        %396 = sbr.rel (%p394) target = $region52
      $region51: #{tpu_custom_call.1} parent=5 // pred_region
        %s397 = ssub.s32 %s13, 2
        // Predicated region
        $region53: #{tpu_custom_call.1} parent=51 // pred_check
          %p398 = pneg %p171
        $region54: #{tpu_custom_call.1} parent=51 // pred_check_branch
          %400 = sbr.rel (%p398) target = $region56
        $region55: #{tpu_custom_call.1} parent=51 // pred_region
          %p401 = scmp.lt.s32.totalorder %s26, 1
          %s402 = scalar_select %p401, %s26, 1
          %p403 = scmp.lt.s32.totalorder %s28, 0
          %s404 = scalar_select %p403, %s28, 0
          %p405 = scmp.lt.s32.totalorder %s27, 0
          %s406 = scalar_select %p405, %s27, 0
          %s407 = sadd.s32 %s406, %s404
          %s408 = sadd.s32 %s407, %s402
          %s409 = smul.addr %s408, 8
          %s410 = scalar_lea.vmem %s4, %s409
        $region56: #{tpu_custom_call.1} parent=51 // pred_fallthru
          _
      $region52: #{tpu_custom_call.1} parent=5 // pred_fallthru
        _
    $region6: #{tpu_custom_call.1} parent=1 // loop_footer
      %s17 = sadd.s32 1, %s13
    $region7: #{tpu_custom_call.1} parent=1 // loop_footer_branch
      %12 = sbr.rel target = $region3
    $region8: #{tpu_custom_call.1} parent=1 // loop_exit
      _
    %411 = vsyncpa [#allocation4], 1
    %s412 = scalar_lea.sflag [#allocation4], 1
    %413 = vsyncpa %s412, 1

</llo_original>
